<compile_context>
chip_gen: v7x
topology: tpu7x:2x2x1
jax: 0.10.0
libtpu: 0.0.40
codegen_flags: <defaults>
</compile_context>

<pallas_src>
import jax
import jax.numpy as jnp
from jax.experimental import pallas as pl
from jax.experimental.pallas import tpu as pltpu


def gradmap_kernel(vw_ref, m_ref, mt_ref, fs_ref, sp_ref, a_ref):
    I = vw_ref.shape[0] // 2

    VW = vw_ref[...]           # (2I, Df)  fused [V@W1 ; V@W2] (hoisted, shared)
    Fs = fs_ref[0]             # (Df, TB*R) current batch tile, lane axis TB*R
    M = m_ref[...]             # (TB*R, TB) one-hot segment matrix (shared)
    Mt = mt_ref[...]           # (TB, TB*R) its transpose (shared)

    # Single MXU pass for both projections: (2I, Df) x (Df, TB*R).
    SA = jnp.dot(VW, Fs, preferred_element_type=jnp.float32)   # (2I, TB*R)
    S = SA[:I]                 # (I, TB*R)   V@W1@Fs
    Alog = SA[I:]              # (I, TB*R)   V@W2@Fs

    # Softmax over R within each (i, batch) segment.  Row-global max is
    # constant within every segment -> same softmax, but stays 2D/lane-dense.
    Alog = Alog - jnp.max(Alog, axis=-1, keepdims=True)
    E = jnp.exp(Alog)
    seg_sum = jnp.dot(E, M, preferred_element_type=jnp.float32)   # (I, TB)
    inv = pl.reciprocal(seg_sum, approx=False)                    # EUP slot
    A = E * jnp.dot(inv, Mt, preferred_element_type=jnp.float32)  # (I, TB*R)

    # S_p[i, b] = sum_r A[i, b, r] * S[i, b, r]  (segment sum via MXU)
    Sp = jnp.dot(A * S, M, preferred_element_type=jnp.float32)    # (I, TB)

    a_ref[0] = A
    sp_ref[0] = Sp


def _pick_block_b(B, Df, R, I, budget_bytes=6 << 20):
    """Largest batch-tile (divisor of B) whose per-step VMEM stays bounded."""
    best = 1
    for tb in range(1, B + 1):
        if B % tb:
            continue
        lanes = tb * R
        # double-buffered Fs in-block + A out-block + small S_p block, f32
        step_bytes = 2 * 4 * lanes * (Df + I) + 2 * 4 * I * tb
        if step_bytes <= budget_bytes:
            best = tb
    return best


def gradmap_forward(V, W1, W2, att, Fs_img, *, block_b=None, vmem_limit_bytes=None):
    """Fs_img: (B, dim_f, H, W) float32.  Returns (S_pp (B, N), A (B, I, R))."""
    B, Df, H, W = Fs_img.shape
    R = H * W
    I, Dv = V.shape

    # (1) Hoist batch-invariant projections out of the grid loop and fuse the
    #     two projections into one (2I, Df) MXU operand.
    VW = jnp.concatenate(
        [jnp.dot(V, W1, preferred_element_type=jnp.float32),
         jnp.dot(V, W2, preferred_element_type=jnp.float32)], axis=0)     # (2I, Df)

    tb = _pick_block_b(B, Df, R, I) if block_b is None else block_b
    assert B % tb == 0, "block_b must divide the batch size"
    nt = B // tb
    L = tb * R                                  # merged lane width per step

    # (2) Layout plumbing in XLA: contraction axis Df, lane axis TB*R.
    Fs = Fs_img.reshape(B, Df, R)               # same reshape as computGrad
    Fs_t = (Fs.reshape(nt, tb, Df, R)
              .transpose(0, 2, 1, 3)
              .reshape(nt, Df, L))              # (nt, Df, TB*R)

    # One-hot segment matrices (per-(i,b) softmax reductions done on the MXU).
    seg = jnp.arange(L, dtype=jnp.int32) // R
    M = (seg[:, None] == jnp.arange(tb, dtype=jnp.int32)[None, :]).astype(jnp.float32)
    Mt = M.T                                    # (tb, L)

    out_shape = (
        jax.ShapeDtypeStruct((nt, I, tb), jnp.float32),   # S_p tiles
        jax.ShapeDtypeStruct((nt, I, L), jnp.float32),    # A tiles
    )

    grid_spec = pltpu.PrefetchScalarGridSpec(
        num_scalar_prefetch=0,
        grid=(nt,),
        in_specs=[
            pl.BlockSpec((2 * I, Df), lambda t: (0, 0)),   # fused VW (shared)
            pl.BlockSpec((L, tb), lambda t: (0, 0)),       # segment matrix
            pl.BlockSpec((tb, L), lambda t: (0, 0)),       # its transpose
            pl.BlockSpec((1, Df, L), lambda t: (t, 0, 0)),  # Fs batch tile
        ],
        out_specs=[
            pl.BlockSpec((1, I, tb), lambda t: (t, 0, 0)),  # S_p
            pl.BlockSpec((1, I, L), lambda t: (t, 0, 0)),   # A (lane-dense)
        ],
    )

    cp = dict(dimension_semantics=("parallel",))
    if vmem_limit_bytes is not None:
        cp["vmem_limit_bytes"] = vmem_limit_bytes

    sp_tiles, a_tiles = pl.pallas_call(
        gradmap_kernel,
        out_shape=out_shape,
        grid_spec=grid_spec,
        compiler_params=pltpu.CompilerParams(**cp),
    )(VW, M, Mt, Fs_t)

    # (3) Epilogue + un-plumbing in XLA (tiny): S_pp = S_p @ att.T, A -> (B,I,R)
    S_p = sp_tiles.transpose(0, 2, 1).reshape(B, I)                     # (B, I)
    A = (a_tiles.reshape(nt, I, tb, R)
                .transpose(0, 2, 1, 3)
                .reshape(B, I, R))                                      # (B, I, R)
    S_pp = jnp.dot(S_p, att.T, preferred_element_type=jnp.float32)      # (B, N)
    return S_pp, A


def gradmap_forward_ref(V, W1, W2, att, Fs_img):
    """Pure-JAX reference of the PyTorch forward (uniform_att_2=False)."""
    B, Df, H, W = Fs_img.shape
    Fs = Fs_img.reshape(B, Df, H * W)
    S = jnp.einsum('iv,vf,bfr->bir', V, W1, Fs)
    A = jnp.einsum('iv,vf,bfr->bir', V, W2, Fs)
    A = jax.nn.softmax(A, axis=-1)
    S_p = jnp.einsum('bir,bir->bi', A, S)
    S_pp = jnp.einsum('ki,bi->bk', att, S_p)
    return S_pp, A


if __name__ == "__main__":
    # Small, module-consistent shapes
    B = 2          # batch
    N = 8          # n classes
    I = 16         # attsize
    Dv = 32        # dim_v
    Df = 64        # dim_f (feature channels)
    H = W = 4      # spatial -> R = 16

    key = jax.random.PRNGKey(0)
    k_v, k_att, k_w1, k_w2, k_fs = jax.random.split(key, 5)

    V = jax.random.normal(k_v, (I, Dv), dtype=jnp.float32)
    att = jax.random.normal(k_att, (N, I), dtype=jnp.float32)
    W1 = jax.random.normal(k_w1, (Dv, Df), dtype=jnp.float32)
    # module inits W_2 to zeros; use a small random W_2 here so the softmax
    # path is actually exercised by the correctness check.
    W2 = 0.1 * jax.random.normal(k_w2, (Dv, Df), dtype=jnp.float32)

    Fs_img = jax.random.normal(k_fs, (B, Df, H, W), dtype=jnp.float32)

    S_pp, A = gradmap_forward(V, W1, W2, att, Fs_img)
    jax.block_until_ready((S_pp, A))

    S_pp_ref, A_ref = gradmap_forward_ref(V, W1, W2, att, Fs_img)
    assert jnp.allclose(S_pp, S_pp_ref, atol=1e-3, rtol=1e-3), "S_pp mismatch"
    assert jnp.allclose(A, A_ref, atol=1e-5, rtol=1e-5), "A mismatch"

    # TODO(synk): computGrad / loss helpers use torch.autograd on the forward;
    # they are training-side host logic, not part of the forward kernel.
    print("KERNEL_OK")
</pallas_src>

<mosaic_0001>
module attributes {stable_mosaic.version = 11 : i64} {
  func.func @gradmap_kernel(%arg0: i32, %arg1: memref<32x64xf32, #tpu.memory_space<vmem>>, %arg2: memref<32x2xf32, #tpu.memory_space<vmem>>, %arg3: memref<2x32xf32, #tpu.memory_space<vmem>>, %arg4: memref<1x64x32xf32, #tpu.memory_space<vmem>>, %arg5: memref<1x16x2xf32, #tpu.memory_space<vmem>>, %arg6: memref<1x16x32xf32, #tpu.memory_space<vmem>>) attributes {dimension_semantics = [#tpu.dimension_semantics<parallel>], iteration_bounds = array<i64: 1>, scalar_prefetch = 0 : i64, scratch_operands = 0 : i64, tpu.core_type = #tpu.core_type<tc>, window_params = [{pipeline_mode = #tpu.pipeline_mode<synchronous>, transform_indices = @transform_0, window_bounds = array<i64: 32, 64>}, {pipeline_mode = #tpu.pipeline_mode<synchronous>, transform_indices = @transform_1, window_bounds = array<i64: 32, 2>}, {pipeline_mode = #tpu.pipeline_mode<synchronous>, transform_indices = @transform_2, window_bounds = array<i64: 2, 32>}, {transform_indices = @transform_3, window_bounds = array<i64: 1, 64, 32>}, {transform_indices = @transform_4, window_bounds = array<i64: 1, 16, 2>}, {transform_indices = @transform_5, window_bounds = array<i64: 1, 16, 32>}]} {
    %c0 = arith.constant 0 : index
    %c0_0 = arith.constant 0 : index
    %0 = vector.load %arg1[%c0, %c0_0] : memref<32x64xf32, #tpu.memory_space<vmem>>, vector<32x64xf32>
    %c0_1 = arith.constant 0 : index
    %c0_2 = arith.constant 0 : index
    %c0_3 = arith.constant 0 : index
    %1 = vector.load %arg4[%c0_1, %c0_2, %c0_3] : memref<1x64x32xf32, #tpu.memory_space<vmem>>, vector<1x64x32xf32>
    %2 = vector.shape_cast %1 : vector<1x64x32xf32> to vector<64x32xf32>
    %c0_4 = arith.constant 0 : index
    %c0_5 = arith.constant 0 : index
    %3 = vector.load %arg2[%c0_4, %c0_5] : memref<32x2xf32, #tpu.memory_space<vmem>>, vector<32x2xf32>
    %c0_6 = arith.constant 0 : index
    %c0_7 = arith.constant 0 : index
    %4 = vector.load %arg3[%c0_6, %c0_7] : memref<2x32xf32, #tpu.memory_space<vmem>>, vector<2x32xf32>
    %cst = arith.constant dense<0.000000e+00> : vector<32x32xf32>
    %5 = tpu.matmul %0, %2, %cst {dimension_numbers = #tpu.dot_dimension_numbers<[1], [0], [0], [1], [0, 0, 1, 1], [], []>} : vector<32x64xf32>, vector<64x32xf32>, vector<32x32xf32> -> vector<32x32xf32>
    %6 = vector.extract_strided_slice %5 {offsets = [0, 0], sizes = [16, 32], strides = [1, 1]} : vector<32x32xf32> to vector<16x32xf32>
    %7 = vector.extract_strided_slice %5 {offsets = [16, 0], sizes = [16, 32], strides = [1, 1]} : vector<32x32xf32> to vector<16x32xf32>
    %cst_8 = arith.constant dense<0xFF800000> : vector<16xf32>
    %8 = vector.multi_reduction <maximumf>, %7, %cst_8 [1] : vector<16x32xf32> to vector<16xf32>
    %9 = vector.shape_cast %8 : vector<16xf32> to vector<16x1xf32>
    %10 = vector.broadcast %9 : vector<16x1xf32> to vector<16x32xf32>
    %11 = arith.subf %7, %10 : vector<16x32xf32>
    %12 = math.exp %11 : vector<16x32xf32>
    %cst_9 = arith.constant dense<0.000000e+00> : vector<16x2xf32>
    %13 = tpu.matmul %12, %3, %cst_9 {dimension_numbers = #tpu.dot_dimension_numbers<[1], [0], [0], [1], [0, 0, 1, 1], [], []>} : vector<16x32xf32>, vector<32x2xf32>, vector<16x2xf32> -> vector<16x2xf32>
    %14 = tpu.reciprocal %13 : vector<16x2xf32> -> vector<16x2xf32>
    %cst_10 = arith.constant dense<0.000000e+00> : vector<16x32xf32>
    %15 = tpu.matmul %14, %4, %cst_10 {dimension_numbers = #tpu.dot_dimension_numbers<[1], [0], [0], [1], [0, 0, 1, 1], [], []>} : vector<16x2xf32>, vector<2x32xf32>, vector<16x32xf32> -> vector<16x32xf32>
    %16 = arith.mulf %12, %15 : vector<16x32xf32>
    %17 = arith.mulf %16, %6 : vector<16x32xf32>
    %cst_11 = arith.constant dense<0.000000e+00> : vector<16x2xf32>
    %18 = tpu.matmul %17, %3, %cst_11 {dimension_numbers = #tpu.dot_dimension_numbers<[1], [0], [0], [1], [0, 0, 1, 1], [], []>} : vector<16x32xf32>, vector<32x2xf32>, vector<16x2xf32> -> vector<16x2xf32>
    %c0_12 = arith.constant 0 : index
    %c0_13 = arith.constant 0 : index
    %c0_14 = arith.constant 0 : index
    %19 = vector.load %arg6[%c0_12, %c0_13, %c0_14] : memref<1x16x32xf32, #tpu.memory_space<vmem>>, vector<1x16x32xf32>
    %20 = vector.shape_cast %19 : vector<1x16x32xf32> to vector<16x32xf32>
    %21 = vector.shape_cast %16 : vector<16x32xf32> to vector<1x16x32xf32>
    tpu.vector_store %arg6[%c0_12, %c0_13, %c0_14], %21 {strides = array<i32>} : memref<1x16x32xf32, #tpu.memory_space<vmem>>, vector<1x16x32xf32>,
    %c0_15 = arith.constant 0 : index
    %c0_16 = arith.constant 0 : index
    %c0_17 = arith.constant 0 : index
    %22 = vector.load %arg5[%c0_15, %c0_16, %c0_17] : memref<1x16x2xf32, #tpu.memory_space<vmem>>, vector<1x16x2xf32>
    %23 = vector.shape_cast %22 : vector<1x16x2xf32> to vector<16x2xf32>
    %24 = vector.shape_cast %18 : vector<16x2xf32> to vector<1x16x2xf32>
    tpu.vector_store %arg5[%c0_15, %c0_16, %c0_17], %24 {strides = array<i32>} : memref<1x16x2xf32, #tpu.memory_space<vmem>>, vector<1x16x2xf32>,
    return
  }
  func.func @transform_0(%arg0: i32) -> (i32, i32) {
    %c0_i32 = arith.constant 0 : i32
    %c0_i32_0 = arith.constant 0 : i32
    %c0_i32_1 = arith.constant 0 : i32
    return %c0_i32, %c0_i32_0 : i32, i32
  }
  func.func @transform_1(%arg0: i32) -> (i32, i32) {
    %c0_i32 = arith.constant 0 : i32
    %c0_i32_0 = arith.constant 0 : i32
    %c0_i32_1 = arith.constant 0 : i32
    return %c0_i32, %c0_i32_0 : i32, i32
  }
  func.func @transform_2(%arg0: i32) -> (i32, i32) {
    %c0_i32 = arith.constant 0 : i32
    %c0_i32_0 = arith.constant 0 : i32
    %c0_i32_1 = arith.constant 0 : i32
    return %c0_i32, %c0_i32_0 : i32, i32
  }
  func.func @transform_3(%arg0: i32) -> (i32, i32, i32) {
    %c0_i32 = arith.constant 0 : i32
    %c0_i32_0 = arith.constant 0 : i32
    %c0_i32_1 = arith.constant 0 : i32
    return %arg0, %c0_i32, %c0_i32_0 : i32, i32, i32
  }
  func.func @transform_4(%arg0: i32) -> (i32, i32, i32) {
    %c0_i32 = arith.constant 0 : i32
    %c0_i32_0 = arith.constant 0 : i32
    %c0_i32_1 = arith.constant 0 : i32
    return %arg0, %c0_i32, %c0_i32_0 : i32, i32, i32
  }
  func.func @transform_5(%arg0: i32) -> (i32, i32, i32) {
    %c0_i32 = arith.constant 0 : i32
    %c0_i32_0 = arith.constant 0 : i32
    %c0_i32_1 = arith.constant 0 : i32
    return %arg0, %c0_i32, %c0_i32_0 : i32, i32, i32
  }
}

</mosaic_0001>

<llo_original>
// kernel: tpu_custom_call.1
$region0: #{tpu_custom_call.1}
  #allocation0 [shape = 'u32[]', space=smem, size = 0x4, offset = 0x4, fixed_abs, tag = 'smem constant byte address 0x4 - core index']
  #allocation1 [shape = 'u32[144,128]{1,0:T(1,128)}', space=vmem, size = 0x12000, scoped, tag = 'internal scratch']
  %s0 = inlined_call_operand.vmem [shape: f32[32,64], index: 0, kind: input, shape index: {}]
  %s1 = inlined_call_operand.vmem [shape: f32[32,2], index: 1, kind: input, shape index: {}]
  %s2 = inlined_call_operand.vmem [shape: f32[2,32], index: 2, kind: input, shape index: {}]
  %s3 = inlined_call_operand.vmem [shape: f32[1,64,32], index: 3, kind: input, shape index: {}]
  %s4 = inlined_call_operand.vmem [shape: f32[1,16,2], index: 4, kind: output, shape index: {0}]
  %s5 = inlined_call_operand.hbm [shape: f32[1,16,32], index: 5, kind: output, shape index: {1}]
  %6 = xla_tuple %s4, %s5
  %s7 = sld [smem:[#allocation0]]
  $region34: #{tpu_custom_call.1} parent=0
    _
  %s9 = ssub.s32 1, %s7
  %s10 = scalar_select 0, %s9, %s7
  $region1: #{tpu_custom_call.1} parent=0
    #allocation2 [shape = 'u8[8192]{0}', space=vmem, size = 0x2000, scoped, tag = 'output window, operand 1, single buffered']
    #allocation3 [shape = 's32[1]{0}', space=sflag, size = 0x4, scoped, tag = 'scoped memory for tpu_custom_call.1']
    %11 = vsyncpa [#allocation3], 0
    // Predicated region
    $region2: #{tpu_custom_call.1} parent=1 // pred_check
      _
    $region3: #{tpu_custom_call.1} parent=1 // pred_check_branch
      %13 = sbr.rel (0) target = $region5
    $region4: #{tpu_custom_call.1} parent=1 // pred_region
      _
    $region5: #{tpu_custom_call.1} parent=1 // pred_fallthru
      _
    // Predicated region
    $region6: #{tpu_custom_call.1} parent=1 // pred_check
      _
    $region7: #{tpu_custom_call.1} parent=1 // pred_check_branch
      %15 = sbr.rel (0) target = $region9
    $region8: #{tpu_custom_call.1} parent=1 // pred_region
      _
    $region9: #{tpu_custom_call.1} parent=1 // pred_fallthru
      _
    // Predicated region
    $region10: #{tpu_custom_call.1} parent=1 // pred_check
      _
    $region11: #{tpu_custom_call.1} parent=1 // pred_check_branch
      %17 = sbr.rel (0) target = $region13
    $region12: #{tpu_custom_call.1} parent=1 // pred_region
      _
    $region13: #{tpu_custom_call.1} parent=1 // pred_fallthru
      _
    // Predicated region
    $region14: #{tpu_custom_call.1} parent=1 // pred_check
      _
    $region15: #{tpu_custom_call.1} parent=1 // pred_check_branch
      %19 = sbr.rel (0) target = $region17
    $region16: #{tpu_custom_call.1} parent=1 // pred_region
      _
    $region17: #{tpu_custom_call.1} parent=1 // pred_fallthru
      _
    %v20 = vld [vmem:[%s0] sm:$0xff]
    %v21 = vld [vmem:[%s0 + $0x8] sm:$0xff]
    %v22 = vld [vmem:[%s0 + $0x10] sm:$0xff]
    %v23 = vld [vmem:[%s0 + $0x18] sm:$0xff]
    %v24 = vld [vmem:[%s3] sm:$0xff]
    %v25 = vld [vmem:[%s3 + $0x8] sm:$0xff]
    %v26 = vld [vmem:[%s3 + $0x10] sm:$0xff]
    %v27 = vld [vmem:[%s3 + $0x18] sm:$0xff]
    %v28 = vld [vmem:[%s3 + $0x20] sm:$0xff]
    %v29 = vld [vmem:[%s3 + $0x28] sm:$0xff]
    %v30 = vld [vmem:[%s3 + $0x30] sm:$0xff]
    %v31 = vld [vmem:[%s3 + $0x38] sm:$0xff]
    %v32 = vld [vmem:[%s1] sm:$0xff]
    %v33 = vld [vmem:[%s1 + $0x8] sm:$0xff]
    %v34 = vld [vmem:[%s1 + $0x10] sm:$0xff]
    %v35 = vld [vmem:[%s1 + $0x18] sm:$0xff]
    %v36 = vld [vmem:[%s2] sm:$0x3]
    %vm37 = vcmask 523264
    %v39 = vsel %vm37, %v20, 0
    %v42 = vsel %vm37, %v21, 0
    %v45 = vsel %vm37, %v22, 0
    %v48 = vsel %vm37, %v23, 0
    %50 = vmatprep.subr.mxu0 0.0
    %51 = vmatpush1.msra.mxu0 %v24
    %52 = vmatprep.subr.mxu0 0.0
    %53 = vmatpush1.msra.mxu0 %v25
    %54 = vmatprep.subr.mxu0 0.0
    %55 = vmatpush1.msra.mxu0 %v26
    %56 = vmatprep.subr.mxu0 0.0
    %57 = vmatpush1.msra.mxu0 %v27
    %58 = vmatprep.subr.mxu0 0.0
    %59 = vmatpush1.msra.mxu0 %v28
    %60 = vmatprep.subr.mxu0 0.0
    %61 = vmatpush1.msra.mxu0 %v29
    %62 = vmatprep.subr.mxu0 0.0
    %63 = vmatpush1.msra.mxu0 %v30
    %64 = vmatprep.subr.mxu0 0.0
    %65 = vmatpush1.msra.mxu0 %v31
    %66 = vmatprep.subr.mxu0 0.0
    %67 = vmatpush1.msra.mxu0 0.0
    %68 = vmatprep.subr.mxu0 0.0
    %69 = vmatpush1.msra.mxu0 0.0
    %70 = vmatprep.subr.mxu0 0.0
    %71 = vmatpush1.msra.mxu0 0.0
    %72 = vmatprep.subr.mxu0 0.0
    %73 = vmatpush1.msra.mxu0 0.0
    %74 = vmatprep.subr.mxu0 0.0
    %75 = vmatpush1.msra.mxu0 0.0
    %76 = vmatprep.subr.mxu0 0.0
    %77 = vmatpush1.msra.mxu0 0.0
    %78 = vmatprep.subr.mxu0 0.0
    %79 = vmatpush1.msra.mxu0 0.0
    %80 = vmatprep.subr.mxu0 0.0
    %81 = vmatpush1.msra.mxu0 0.0
    %82 = vmatprep.subr.mxu0 0.0
    %83 = vmatpush1.msra.mxu0 0.0
    %84 = vmatprep.subr.mxu0 0.0
    %85 = vmatpush1.msra.mxu0 0.0
    %86 = vmatprep.subr.mxu0 0.0
    %87 = vmatpush1.msra.mxu0 0.0
    %88 = vmatprep.subr.mxu0 0.0
    %89 = vmatpush1.msra.mxu0 0.0
    %90 = vmatprep.subr.mxu0 0.0
    %91 = vmatpush1.msra.mxu0 0.0
    %92 = vmatprep.subr.mxu0 0.0
    %93 = vmatpush1.msra.mxu0 0.0
    %94 = vmatprep.subr.mxu0 0.0
    %95 = vmatpush1.msra.mxu0 0.0
    %96 = vmatprep.subr.mxu0 0.0
    %97 = vmatpush1.msra.mxu0 0.0
    %98 = vmatprep.subr.mxu0 0.0
    %99 = vmatpush1.msra.mxu0 0.0
    %100 = vmatprep.subr.mxu0 0.0
    %101 = vmatpush1.msra.mxu0 0.0
    %102 = vmatprep.subr.mxu0 0.0
    %103 = vmatpush1.msra.mxu0 0.0
    %104 = vmatprep.subr.mxu0 0.0
    %105 = vmatpush1.msra.mxu0 0.0
    %106 = vmatprep.subr.mxu0 0.0
    %107 = vmatpush1.msra.mxu0 0.0
    %108 = vmatprep.subr.mxu0 0.0
    %109 = vmatpush1.msra.mxu0 0.0
    %110 = vmatprep.subr.mxu0 0.0
    %111 = vmatpush1.msra.mxu0 0.0
    %112 = vmatprep.subr.mxu0 0.0
    %113 = vmatpush1.msra.mxu0 0.0
    %114 = vmatprep.mubr.f32.mxu0 0.0
    %115 = vmatmul.mubr.f32.gmra.mrb[0].mxu0 %v39
    %v116 = vpop.f32.mrb[0].mxu0
    %v117 = vadd.f32 0.0, %v116
    %v118 = vpop.f32.mrb[0].mxu0
    %119 = vmatprep.mubr.f32.mxu0 0.0
    %120 = vmatmul.mubr.f32.gmra.mrb[0].mxu0 %v42
    %v121 = vpop.f32.mrb[0].mxu0
    %v122 = vadd.f32 0.0, %v121
    %v123 = vpop.f32.mrb[0].mxu0
    %124 = vmatprep.mubr.f32.mxu0 0.0
    %125 = vmatmul.mubr.f32.gmra.mrb[0].mxu0 %v45
    %v126 = vpop.f32.mrb[0].mxu0
    %v127 = vadd.f32 0.0, %v126
    %v128 = vpop.f32.mrb[0].mxu0
    %129 = vmatprep.mubr.f32.mxu0 0.0
    %130 = vmatmul.mubr.f32.gmra.mrb[0].mxu0 %v48
    %v131 = vpop.f32.mrb[0].mxu0
    %v132 = vadd.f32 0.0, %v131
    %v133 = vpop.f32.mrb[0].mxu0
    %134 = vdwg.mxu0
    %vm135 = vcmask 261120
    %v136 = vsel %vm135, %v127, -inf
    %137 = vmax.xlane.f32.xlu0 %v136
    %v138 = vpop.xlane.xlu0 %137
    %v139 = vsel %vm135, %v132, -inf
    %140 = vmax.xlane.f32.xlu0 %v139
    %v141 = vpop.xlane.xlu0 %140
    %v142 = vsub.f32 %v127, %v138
    %v143 = vsub.f32 %v132, %v141
    %v144 = vmul.f32 %v142, 1.442695
    %v145 = vpow.pop %v144
    %v146 = vmul.f32 %v143, 1.442695
    %v147 = vpow.pop %v146
    %v149 = vsel %vm135, %v145, 0
    %v152 = vsel %vm135, %v147, 0
    %154 = vmatprep.subr.mxu0 0.0
    %155 = vmatpush1.msra.mxu0 %v32
    %156 = vmatprep.subr.mxu0 0.0
    %157 = vmatpush1.msra.mxu0 %v33
    %158 = vmatprep.subr.mxu0 0.0
    %159 = vmatpush1.msra.mxu0 %v34
    %160 = vmatprep.subr.mxu0 0.0
    %161 = vmatpush1.msra.mxu0 %v35
    %162 = vmatprep.subr.mxu0 0.0
    %163 = vmatpush1.msra.mxu0 0.0
    %164 = vmatprep.subr.mxu0 0.0
    %165 = vmatpush1.msra.mxu0 0.0
    %166 = vmatprep.subr.mxu0 0.0
    %167 = vmatpush1.msra.mxu0 0.0
    %168 = vmatprep.subr.mxu0 0.0
    %169 = vmatpush1.msra.mxu0 0.0
    %170 = vmatprep.subr.mxu0 0.0
    %171 = vmatpush1.msra.mxu0 0.0
    %172 = vmatprep.subr.mxu0 0.0
    %173 = vmatpush1.msra.mxu0 0.0
    %174 = vmatprep.subr.mxu0 0.0
    %175 = vmatpush1.msra.mxu0 0.0
    %176 = vmatprep.subr.mxu0 0.0
    %177 = vmatpush1.msra.mxu0 0.0
    %178 = vmatprep.subr.mxu0 0.0
    %179 = vmatpush1.msra.mxu0 0.0
    %180 = vmatprep.subr.mxu0 0.0
    %181 = vmatpush1.msra.mxu0 0.0
    %182 = vmatprep.subr.mxu0 0.0
    %183 = vmatpush1.msra.mxu0 0.0
    %184 = vmatprep.subr.mxu0 0.0
    %185 = vmatpush1.msra.mxu0 0.0
    %186 = vmatprep.subr.mxu0 0.0
    %187 = vmatpush1.msra.mxu0 0.0
    %188 = vmatprep.subr.mxu0 0.0
    %189 = vmatpush1.msra.mxu0 0.0
    %190 = vmatprep.subr.mxu0 0.0
    %191 = vmatpush1.msra.mxu0 0.0
    %192 = vmatprep.subr.mxu0 0.0
    %193 = vmatpush1.msra.mxu0 0.0
    %194 = vmatprep.subr.mxu0 0.0
    %195 = vmatpush1.msra.mxu0 0.0
    %196 = vmatprep.subr.mxu0 0.0
    %197 = vmatpush1.msra.mxu0 0.0
    %198 = vmatprep.subr.mxu0 0.0
    %199 = vmatpush1.msra.mxu0 0.0
    %200 = vmatprep.subr.mxu0 0.0
    %201 = vmatpush1.msra.mxu0 0.0
    %202 = vmatprep.subr.mxu0 0.0
    %203 = vmatpush1.msra.mxu0 0.0
    %204 = vmatprep.subr.mxu0 0.0
    %205 = vmatpush1.msra.mxu0 0.0
    %206 = vmatprep.subr.mxu0 0.0
    %207 = vmatpush1.msra.mxu0 0.0
    %208 = vmatprep.subr.mxu0 0.0
    %209 = vmatpush1.msra.mxu0 0.0
    %210 = vmatprep.subr.mxu0 0.0
    %211 = vmatpush1.msra.mxu0 0.0
    %212 = vmatprep.subr.mxu0 0.0
    %213 = vmatpush1.msra.mxu0 0.0
    %214 = vmatprep.subr.mxu0 0.0
    %215 = vmatpush1.msra.mxu0 0.0
    %216 = vmatprep.subr.mxu0 0.0
    %217 = vmatpush1.msra.mxu0 0.0
    %218 = vmatprep.mubr.f32.mxu0 0.0
    %219 = vmatmul.mubr.f32.gmra.mrb[0].mxu0 %v149
    %v220 = vpop.f32.mrb[0].mxu0
    %v221 = vadd.f32 0.0, %v220
    %v222 = vpop.f32.mrb[0].mxu0
    %223 = vmatprep.mubr.f32.mxu0 0.0
    %224 = vmatmul.mubr.f32.gmra.mrb[0].mxu0 %v152
    %v225 = vpop.f32.mrb[0].mxu0
    %v226 = vadd.f32 0.0, %v225
    %v227 = vpop.f32.mrb[0].mxu0
    %228 = vdwg.mxu0
    %v229 = vrcp.pop %v221
    %v230 = vrcp.pop %v226
    %vm231 = vcmask 15360
    %v233 = vsel %vm231, %v229, 0
    %v236 = vsel %vm231, %v230, 0
    %vm238 = vcmask 1041408
    %v240 = vsel %vm238, %v36, 0
    %242 = vmatprep.subr.mxu0 0.0
    %243 = vmatpush1.msra.mxu0 %v240
    %244 = vmatprep.subr.mxu0 0.0
    %245 = vmatpush1.msra.mxu0 0.0
    %246 = vmatprep.subr.mxu0 0.0
    %247 = vmatpush1.msra.mxu0 0.0
    %248 = vmatprep.subr.mxu0 0.0
    %249 = vmatpush1.msra.mxu0 0.0
    %250 = vmatprep.subr.mxu0 0.0
    %251 = vmatpush1.msra.mxu0 0.0
    %252 = vmatprep.subr.mxu0 0.0
    %253 = vmatpush1.msra.mxu0 0.0
    %254 = vmatprep.subr.mxu0 0.0
    %255 = vmatpush1.msra.mxu0 0.0
    %256 = vmatprep.subr.mxu0 0.0
    %257 = vmatpush1.msra.mxu0 0.0
    %258 = vmatprep.subr.mxu0 0.0
    %259 = vmatpush1.msra.mxu0 0.0
    %260 = vmatprep.subr.mxu0 0.0
    %261 = vmatpush1.msra.mxu0 0.0
    %262 = vmatprep.subr.mxu0 0.0
    %263 = vmatpush1.msra.mxu0 0.0
    %264 = vmatprep.subr.mxu0 0.0
    %265 = vmatpush1.msra.mxu0 0.0
    %266 = vmatprep.subr.mxu0 0.0
    %267 = vmatpush1.msra.mxu0 0.0
    %268 = vmatprep.subr.mxu0 0.0
    %269 = vmatpush1.msra.mxu0 0.0
    %270 = vmatprep.subr.mxu0 0.0
    %271 = vmatpush1.msra.mxu0 0.0
    %272 = vmatprep.subr.mxu0 0.0
    %273 = vmatpush1.msra.mxu0 0.0
    %274 = vmatprep.subr.mxu0 0.0
    %275 = vmatpush1.msra.mxu0 0.0
    %276 = vmatprep.subr.mxu0 0.0
    %277 = vmatpush1.msra.mxu0 0.0
    %278 = vmatprep.subr.mxu0 0.0
    %279 = vmatpush1.msra.mxu0 0.0
    %280 = vmatprep.subr.mxu0 0.0
    %281 = vmatpush1.msra.mxu0 0.0
    %282 = vmatprep.subr.mxu0 0.0
    %283 = vmatpush1.msra.mxu0 0.0
    %284 = vmatprep.subr.mxu0 0.0
    %285 = vmatpush1.msra.mxu0 0.0
    %286 = vmatprep.subr.mxu0 0.0
    %287 = vmatpush1.msra.mxu0 0.0
    %288 = vmatprep.subr.mxu0 0.0
    %289 = vmatpush1.msra.mxu0 0.0
    %290 = vmatprep.subr.mxu0 0.0
    %291 = vmatpush1.msra.mxu0 0.0
    %292 = vmatprep.subr.mxu0 0.0
    %293 = vmatpush1.msra.mxu0 0.0
    %294 = vmatprep.subr.mxu0 0.0
    %295 = vmatpush1.msra.mxu0 0.0
    %296 = vmatprep.subr.mxu0 0.0
    %297 = vmatpush1.msra.mxu0 0.0
    %298 = vmatprep.subr.mxu0 0.0
    %299 = vmatpush1.msra.mxu0 0.0
    %300 = vmatprep.subr.mxu0 0.0
    %301 = vmatpush1.msra.mxu0 0.0
    %302 = vmatprep.subr.mxu0 0.0
    %303 = vmatpush1.msra.mxu0 0.0
    %304 = vmatprep.subr.mxu0 0.0
    %305 = vmatpush1.msra.mxu0 0.0
    %306 = vmatprep.mubr.f32.mxu0 0.0
    %307 = vmatmul.mubr.f32.gmra.mrb[0].mxu0 %v233
    %v308 = vpop.f32.mrb[0].mxu0
    %v309 = vadd.f32 0.0, %v308
    %v310 = vpop.f32.mrb[0].mxu0
    %311 = vmatprep.mubr.f32.mxu0 0.0
    %312 = vmatmul.mubr.f32.gmra.mrb[0].mxu0 %v236
    %v313 = vpop.f32.mrb[0].mxu0
    %v314 = vadd.f32 0.0, %v313
    %v315 = vpop.f32.mrb[0].mxu0
    %316 = vdwg.mxu0
    %v317 = vmul.f32 %v145, %v309
    %v318 = vmul.f32 %v147, %v314
    %v319 = vmul.f32 %v317, %v117
    %v320 = vmul.f32 %v318, %v122
    %v322 = vsel %vm135, %v319, 0
    %v325 = vsel %vm135, %v320, 0
    %327 = vmatprep.subr.mxu0 0.0
    %328 = vmatpush1.msra.mxu0 %v32
    %329 = vmatprep.subr.mxu0 0.0
    %330 = vmatpush1.msra.mxu0 %v33
    %331 = vmatprep.subr.mxu0 0.0
    %332 = vmatpush1.msra.mxu0 %v34
    %333 = vmatprep.subr.mxu0 0.0
    %334 = vmatpush1.msra.mxu0 %v35
    %335 = vmatprep.subr.mxu0 0.0
    %336 = vmatpush1.msra.mxu0 0.0
    %337 = vmatprep.subr.mxu0 0.0
    %338 = vmatpush1.msra.mxu0 0.0
    %339 = vmatprep.subr.mxu0 0.0
    %340 = vmatpush1.msra.mxu0 0.0
    %341 = vmatprep.subr.mxu0 0.0
    %342 = vmatpush1.msra.mxu0 0.0
    %343 = vmatprep.subr.mxu0 0.0
    %344 = vmatpush1.msra.mxu0 0.0
    %345 = vmatprep.subr.mxu0 0.0
    %346 = vmatpush1.msra.mxu0 0.0
    %347 = vmatprep.subr.mxu0 0.0
    %348 = vmatpush1.msra.mxu0 0.0
    %349 = vmatprep.subr.mxu0 0.0
    %350 = vmatpush1.msra.mxu0 0.0
    %351 = vmatprep.subr.mxu0 0.0
    %352 = vmatpush1.msra.mxu0 0.0
    %353 = vmatprep.subr.mxu0 0.0
    %354 = vmatpush1.msra.mxu0 0.0
    %355 = vmatprep.subr.mxu0 0.0
    %356 = vmatpush1.msra.mxu0 0.0
    %357 = vmatprep.subr.mxu0 0.0
    %358 = vmatpush1.msra.mxu0 0.0
    %359 = vmatprep.subr.mxu0 0.0
    %360 = vmatpush1.msra.mxu0 0.0
    %361 = vmatprep.subr.mxu0 0.0
    %362 = vmatpush1.msra.mxu0 0.0
    %363 = vmatprep.subr.mxu0 0.0
    %364 = vmatpush1.msra.mxu0 0.0
    %365 = vmatprep.subr.mxu0 0.0
    %366 = vmatpush1.msra.mxu0 0.0
    %367 = vmatprep.subr.mxu0 0.0
    %368 = vmatpush1.msra.mxu0 0.0
    %369 = vmatprep.subr.mxu0 0.0
    %370 = vmatpush1.msra.mxu0 0.0
    %371 = vmatprep.subr.mxu0 0.0
    %372 = vmatpush1.msra.mxu0 0.0
    %373 = vmatprep.subr.mxu0 0.0
    %374 = vmatpush1.msra.mxu0 0.0
    %375 = vmatprep.subr.mxu0 0.0
    %376 = vmatpush1.msra.mxu0 0.0
    %377 = vmatprep.subr.mxu0 0.0
    %378 = vmatpush1.msra.mxu0 0.0
    %379 = vmatprep.subr.mxu0 0.0
    %380 = vmatpush1.msra.mxu0 0.0
    %381 = vmatprep.subr.mxu0 0.0
    %382 = vmatpush1.msra.mxu0 0.0
    %383 = vmatprep.subr.mxu0 0.0
    %384 = vmatpush1.msra.mxu0 0.0
    %385 = vmatprep.subr.mxu0 0.0
    %386 = vmatpush1.msra.mxu0 0.0
    %387 = vmatprep.subr.mxu0 0.0
    %388 = vmatpush1.msra.mxu0 0.0
    %389 = vmatprep.subr.mxu0 0.0
    %390 = vmatpush1.msra.mxu0 0.0
    %391 = vmatprep.mubr.f32.mxu0 0.0
    %392 = vmatmul.mubr.f32.gmra.mrb[0].mxu0 %v322
    %v393 = vpop.f32.mrb[0].mxu0
    %v394 = vadd.f32 0.0, %v393
    %v395 = vpop.f32.mrb[0].mxu0
    %396 = vmatprep.mubr.f32.mxu0 0.0
    %397 = vmatmul.mubr.f32.gmra.mrb[0].mxu0 %v325
    %v398 = vpop.f32.mrb[0].mxu0
    %v399 = vadd.f32 0.0, %v398
    %v400 = vpop.f32.mrb[0].mxu0
    %401 = vdwg.mxu0
    %402 = vst.msk [vmem:[#allocation2] sm:$0xff] %vm135, %v317
    %403 = vst.msk [vmem:[#allocation2 + $0x8] sm:$0xff] %vm135, %v318
    %404 = vst.msk [vmem:[%s4] sm:$0xff] %vm231, %v394
    %405 = vst.msk [vmem:[%s4 + $0x8] sm:$0xff] %vm231, %v399
    // Predicated region
    $region18: #{tpu_custom_call.1} parent=1 // pred_check
      _
    $region19: #{tpu_custom_call.1} parent=1 // pred_check_branch
      %407 = sbr.rel (0) target = $region21
    $region20: #{tpu_custom_call.1} parent=1 // pred_region
      _
    $region21: #{tpu_custom_call.1} parent=1 // pred_fallthru
      _
    // Predicated region
    $region22: #{tpu_custom_call.1} parent=1 // pred_check
      _
    $region23: #{tpu_custom_call.1} parent=1 // pred_check_branch
      %409 = sbr.rel (0) target = $region25
    $region24: #{tpu_custom_call.1} parent=1 // pred_region
      %s411 = ssub.s32 256, 256
      %412 = vsyncadd [#allocation3], %s411
      %s413 = sshll.u32 [#allocation2], 4
      %s414 = int_to_ptr.vmem [resolvable:$true] %s413
      %419 = dma.vmem_to_hbm [thread:$0]  %s414, 256, %s5, [#allocation3], 128, 128, 8
    $region25: #{tpu_custom_call.1} parent=1 // pred_fallthru
      _
    // Predicated region
    $region26: #{tpu_custom_call.1} parent=1 // pred_check
      _
    $region27: #{tpu_custom_call.1} parent=1 // pred_check_branch
      %421 = sbr.rel (0) target = $region29
    $region28: #{tpu_custom_call.1} parent=1 // pred_region
      _
    $region29: #{tpu_custom_call.1} parent=1 // pred_fallthru
      _
    // Predicated region
    $region30: #{tpu_custom_call.1} parent=1 // pred_check
      _
    $region31: #{tpu_custom_call.1} parent=1 // pred_check_branch
      %423 = sbr.rel (0) target = $region33
    $region32: #{tpu_custom_call.1} parent=1 // pred_region
      %424 = dma.done [#allocation3], 256
    $region33: #{tpu_custom_call.1} parent=1 // pred_fallthru
      _
    %425 = vsyncpa [#allocation3], 1

</llo_original>
